<compile_context>
chip_gen: v6e
topology: v6e:2x2x1
jax: 0.10.0
libtpu: 0.0.40
codegen_flags: <defaults>
</compile_context>

<pallas_src>
import functools

import jax
import jax.numpy as jnp
from jax import lax
from jax.experimental import pallas as pl
from jax.experimental.pallas import tpu as pltpu


# ---------------------------------------------------------------------------
# Hardware queries (with conservative fallbacks)
# ---------------------------------------------------------------------------
def _device_kind() -> str:
    try:
        return jax.devices()[0].device_kind.lower()
    except Exception:
        return ""


def _vmem_capacity_bytes() -> int:
    try:
        cap = int(pltpu.get_tpu_info().vmem_capacity_bytes)
        if cap > 0:
            return cap
    except Exception:
        pass
    kind = _device_kind()
    if "v5" in kind or "v6" in kind:
        return 128 << 20
    return 64 << 20


def _has_bf16_valu() -> bool:
    # v6e / v7x VPUs have bf16 ALUs; v5e and older do not.
    kind = _device_kind()
    return not any(tag in kind for tag in ("v2", "v3", "v4", "v5"))


# ---------------------------------------------------------------------------
# Shared excitation block (two tiny bias-free FCs + relu + sigmoid), f32 math
# ---------------------------------------------------------------------------
def _excite(s, wa_ref, wb_ref, use_mxu):
    # s: (C, 1) f32 channel means.
    if use_mxu:
        # wa = W1 (R, C), wb = W2 (C, R): two small MXU matmuls, f32 accumulate.
        h = jnp.maximum(
            jnp.dot(wa_ref[...], s, preferred_element_type=jnp.float32), 0.0)
        return jax.nn.sigmoid(
            jnp.dot(wb_ref[...], h, preferred_element_type=jnp.float32))
    # wa = W1^T (C, R), wb = W2 (C, R): VPU broadcast-mul + XLU reduces
    # (avoids MXU push/pop latency on the serial path when C*R is tiny).
    h = jnp.maximum(jnp.sum(wa_ref[...] * s, axis=0, keepdims=True), 0.0)   # (1,R)
    return jax.nn.sigmoid(jnp.sum(wb_ref[...] * h, axis=1, keepdims=True))  # (C,1)


# ---------------------------------------------------------------------------
# Fused kernel: one image per grid step, whole image resident in VMEM
# ---------------------------------------------------------------------------
def _sem_fused_kernel(x_ref, wa_ref, wb_ref, o_ref, *, n128, rem, inv_hw,
                      unroll, use_mxu, compute_dtype):
    # x_ref/o_ref: (1, C, HW); wa_ref/wb_ref: excitation weights (f32).
    C = x_ref.shape[1]
    HW = x_ref.shape[2]

    # ---- pass 1: squeeze (global average pool), f32 accumulation ----------
    def acc_body(j, acc):
        start = pl.multiple_of(j * 128, 128)
        # Pure VALU adds into a lane-wide (C, 128) partial; no per-iter XLU.
        return acc + x_ref[0, :, pl.ds(start, 128)].astype(jnp.float32)

    def tail_sum():
        tail = x_ref[0, :, HW - rem:HW].astype(jnp.float32)   # static masked slice
        return jnp.sum(tail, axis=-1, keepdims=True)

    if n128 > 0:
        acc = lax.fori_loop(0, n128, acc_body,
                            jnp.zeros((C, 128), jnp.float32),
                            unroll=min(unroll, n128))
        s = jnp.sum(acc, axis=-1, keepdims=True)               # one XLU reduce
        if rem > 0:
            s = s + tail_sum()
    else:
        s = tail_sum()
    s = s * inv_hw                                             # (C, 1) mean

    # ---- excitation --------------------------------------------------------
    g = _excite(s, wa_ref, wb_ref, use_mxu)                    # (C, 1) f32

    # ---- pass 2: scale + store, 128-lane-dense stores ----------------------
    g_c = g.astype(compute_dtype)                              # hoisted cast

    def scale_body(j, carry):
        start = pl.multiple_of(j * 128, 128)
        xc = x_ref[0, :, pl.ds(start, 128)].astype(compute_dtype)
        o_ref[0, :, pl.ds(start, 128)] = (xc * g_c).astype(o_ref.dtype)
        return carry

    if n128 > 0:
        lax.fori_loop(0, n128, scale_body, 0, unroll=min(unroll, n128))
    if rem > 0:
        xt = x_ref[0, :, HW - rem:HW].astype(compute_dtype)
        o_ref[0, :, HW - rem:HW] = (xt * g_c).astype(o_ref.dtype)


# ---------------------------------------------------------------------------
# Tiled path, call 1: pooled mean + gate (grid = (N, hw_tiles), reduction on t)
# ---------------------------------------------------------------------------
def _sem_pool_gate_kernel(x_ref, wa_ref, wb_ref, g_ref, acc_ref, *, inv_hw,
                          unroll, use_mxu):
    # x_ref: (1, C, hw_tile); g_ref: (1, C, 1) f32; acc_ref: VMEM (C, 128) f32.
    t = pl.program_id(1)
    n128 = x_ref.shape[2] // 128

    @pl.when(t == 0)
    def _():
        acc_ref[...] = jnp.zeros_like(acc_ref)

    def body(j, acc):
        start = pl.multiple_of(j * 128, 128)
        return acc + x_ref[0, :, pl.ds(start, 128)].astype(jnp.float32)

    acc_ref[...] = lax.fori_loop(0, n128, body, acc_ref[...],
                                 unroll=min(unroll, n128))

    @pl.when(t == pl.num_programs(1) - 1)
    def _():
        s = jnp.sum(acc_ref[...], axis=-1, keepdims=True) * inv_hw
        g_ref[0, :, :] = _excite(s, wa_ref, wb_ref, use_mxu).astype(g_ref.dtype)


# ---------------------------------------------------------------------------
# Tiled path, call 2: scale (grid = (N, hw_tiles), fully parallel)
# ---------------------------------------------------------------------------
def _sem_scale_kernel(g_ref, x_ref, o_ref, *, unroll, compute_dtype):
    n128 = x_ref.shape[2] // 128
    g_c = g_ref[0, :, :].astype(compute_dtype)                 # hoisted cast

    def body(j, carry):
        start = pl.multiple_of(j * 128, 128)
        xc = x_ref[0, :, pl.ds(start, 128)].astype(compute_dtype)
        o_ref[0, :, pl.ds(start, 128)] = (xc * g_c).astype(o_ref.dtype)
        return carry

    lax.fori_loop(0, n128, body, 0, unroll=min(unroll, n128))


# ---------------------------------------------------------------------------
# Wrapper
# ---------------------------------------------------------------------------
def sem_forward(x_nchw, w1, w2, *, mode="auto", excite_on_mxu=None,
                unroll=8, max_hw_tile=8192, alias_input=False):
    """SEM forward.  x_nchw: (N,C,H,W); w1: (R,C) [Conv2d C->R]; w2: (C,R)."""
    N, C, H, W = x_nchw.shape
    R = w1.shape[0]
    HW = H * W
    dtype = x_nchw.dtype
    itemsize = jnp.dtype(dtype).itemsize

    x = x_nchw.reshape(N, C, HW)

    use_mxu = bool(excite_on_mxu) if excite_on_mxu is not None else (C * R >= 32768)
    if use_mxu:
        wa = jnp.asarray(w1, jnp.float32)          # (R, C): MXU matmuls
    else:
        wa = jnp.asarray(w1, jnp.float32).T        # (C, R): VPU broadcast-reduce
    wb = jnp.asarray(w2, jnp.float32)              # (C, R)
    w_bytes = 2 * 4 * (int(wa.size) + int(wb.size))

    # bf16 math only where the VPU has bf16 ALUs; f32 otherwise / for f32 I/O.
    compute_dtype = dtype if (dtype == jnp.bfloat16 and _has_bf16_valu()) else jnp.float32

    cap = int(_vmem_capacity_bytes() * 85 // 100)  # ~56 MiB v7x, ~109 MiB v5e/v6e

    # Fused (whole-image resident) footprint: double-buffered in + out + weights.
    block_bytes = C * HW * itemsize
    fused_needed = 4 * block_bytes + w_bytes + (2 << 20)

    # Tiled geometry (lane-aligned hw tiles, zero-padded remainder).
    hw128 = max(128, -(-HW // 128) * 128)
    hw_tile = max(128, (max(cap // 2, 4 << 20) // (4 * C * itemsize)) // 128 * 128)
    hw_tile = min(hw_tile, hw128, max(128, max_hw_tile // 128 * 128))
    hw_pad = -(-HW // hw_tile) * hw_tile
    n_tiles = hw_pad // hw_tile

    if mode == "fused":
        use_tiled = False
    elif mode == "tiled":
        use_tiled = True
    else:
        fits = fused_needed <= cap
        # N == 1 on a big image: split HW across TensorCores via the tiled path.
        small_batch = (N == 1 and n_tiles >= 2 and block_bytes >= (4 << 20))
        use_tiled = (not fits) or small_batch

    # ---------------------------- fused path --------------------------------
    if not use_tiled:
        n128, rem = HW // 128, HW % 128
        kernel = functools.partial(
            _sem_fused_kernel, n128=n128, rem=rem, inv_hw=1.0 / HW,
            unroll=unroll, use_mxu=use_mxu, compute_dtype=compute_dtype)
        out = pl.pallas_call(
            kernel,
            out_shape=jax.ShapeDtypeStruct((N, C, HW), dtype),
            grid_spec=pltpu.PrefetchScalarGridSpec(
                num_scalar_prefetch=0,
                grid=(N,),
                in_specs=[
                    pl.BlockSpec((1, C, HW), lambda n: (n, 0, 0)),
                    pl.BlockSpec(wa.shape, lambda n: (0, 0)),   # resident weights
                    pl.BlockSpec(wb.shape, lambda n: (0, 0)),
                ],
                out_specs=pl.BlockSpec((1, C, HW), lambda n: (n, 0, 0)),
            ),
            compiler_params=pltpu.CompilerParams(
                dimension_semantics=("parallel",),              # megacore over batch
                vmem_limit_bytes=int(min(max(fused_needed, 32 << 20), cap)),
            ),
            cost_estimate=pl.CostEstimate(
                flops=2 * N * C * HW + 4 * N * R * C,
                transcendentals=N * C,
                bytes_accessed=2 * N * C * HW * itemsize + w_bytes,
            ),
            input_output_aliases=({0: 0} if alias_input else {}),
        )(x, wa, wb)
        return out.reshape(N, C, H, W)

    # ---------------------------- tiled path --------------------------------
    x_p = x if hw_pad == HW else jnp.pad(x, ((0, 0), (0, 0), (0, hw_pad - HW)))
    tiled_needed = 4 * C * hw_tile * itemsize + w_bytes + (2 << 20)
    vmem_limit = int(min(max(tiled_needed, 32 << 20), cap))

    pool_kernel = functools.partial(
        _sem_pool_gate_kernel, inv_hw=1.0 / HW, unroll=unroll, use_mxu=use_mxu)
    gate = pl.pallas_call(
        pool_kernel,
        out_shape=jax.ShapeDtypeStruct((N, C, 1), jnp.float32),
        grid_spec=pltpu.PrefetchScalarGridSpec(
            num_scalar_prefetch=0,
            grid=(N, n_tiles),
            in_specs=[
                pl.BlockSpec((1, C, hw_tile), lambda n, t: (n, 0, t)),
                pl.BlockSpec(wa.shape, lambda n, t: (0, 0)),
                pl.BlockSpec(wb.shape, lambda n, t: (0, 0)),
            ],
            out_specs=pl.BlockSpec((1, C, 1), lambda n, t: (n, 0, 0)),
            scratch_shapes=[pltpu.VMEM((C, 128), jnp.float32)],
        ),
        compiler_params=pltpu.CompilerParams(
            dimension_semantics=("parallel", "arbitrary"),
            vmem_limit_bytes=vmem_limit,
        ),
        cost_estimate=pl.CostEstimate(
            flops=N * C * hw_pad + 4 * N * R * C,
            transcendentals=N * C,
            bytes_accessed=N * C * hw_pad * itemsize + w_bytes,
        ),
    )(x_p, wa, wb)

    scale_kernel = functools.partial(
        _sem_scale_kernel, unroll=unroll, compute_dtype=compute_dtype)
    out = pl.pallas_call(
        scale_kernel,
        out_shape=jax.ShapeDtypeStruct((N, C, hw_pad), dtype),
        grid_spec=pltpu.PrefetchScalarGridSpec(
            num_scalar_prefetch=0,
            grid=(N, n_tiles),
            in_specs=[
                pl.BlockSpec((1, C, 1), lambda n, t: (n, 0, 0)),
                pl.BlockSpec((1, C, hw_tile), lambda n, t: (n, 0, t)),
            ],
            out_specs=pl.BlockSpec((1, C, hw_tile), lambda n, t: (n, 0, t)),
        ),
        compiler_params=pltpu.CompilerParams(
            dimension_semantics=("parallel", "parallel"),
            vmem_limit_bytes=vmem_limit,
        ),
        cost_estimate=pl.CostEstimate(
            flops=N * C * hw_pad,
            transcendentals=0,
            bytes_accessed=2 * N * C * hw_pad * itemsize,
        ),
        input_output_aliases=({1: 0} if alias_input else {}),
    )(gate, x_p)
    return out[:, :, :HW].reshape(N, C, H, W)


def sem_reference(x, w1, w2):
    """Pure-JAX reference matching the PyTorch module (f32 math)."""
    xf = x.astype(jnp.float32)
    s = jnp.mean(xf, axis=(2, 3))                                  # (N, C)
    h = jnp.maximum(jnp.einsum("rc,nc->nr", w1, s), 0.0)
    g = jax.nn.sigmoid(jnp.einsum("cr,nr->nc", w2, h))
    return xf * g[:, :, None, None]


if __name__ == "__main__":
    key = jax.random.PRNGKey(0)

    # ---- test 1: small SEM(ch_out=4, reduction=4), f32, fused path ---------
    N, C, H, W, R = 2, 4, 16, 16, 4
    kx, k1, k2, kx2, k3, k4 = jax.random.split(key, 6)
    x = jax.random.normal(kx, (N, C, H, W), dtype=jnp.float32)
    w1 = 0.1 * jax.random.normal(k1, (R, C), dtype=jnp.float32)    # Conv2d(C->R,1x1)
    w2 = 0.1 * jax.random.normal(k2, (C, R), dtype=jnp.float32)    # Conv2d(R->C,1x1)

    out = jax.block_until_ready(sem_forward(x, w1, w2))
    ref = sem_reference(x, w1, w2)
    assert out.shape == (N, C, H, W)
    assert jnp.allclose(out, ref, atol=1e-5, rtol=1e-5), "f32 fused mismatch"

    # ---- test 2: bf16 I/O (bf16 scale math on v6e/v7x, f32 on older) -------
    x_bf16 = x.astype(jnp.bfloat16)
    out_bf16 = jax.block_until_ready(sem_forward(x_bf16, w1, w2))
    ref_bf16 = sem_reference(x_bf16, w1, w2)
    assert out_bf16.dtype == jnp.bfloat16
    assert jnp.allclose(out_bf16.astype(jnp.float32), ref_bf16,
                        atol=3e-2, rtol=3e-2), "bf16 mismatch"

    # ---- test 3: forced tiled two-call path (reduction + parallel scale) ---
    out_t = jax.block_until_ready(
        sem_forward(x, w1, w2, mode="tiled", max_hw_tile=128))
    assert jnp.allclose(out_t, ref, atol=1e-5, rtol=1e-5), "tiled mismatch"

    # ---- test 4: MXU excitation + non-128 HW tail-only path (HW=64<128) ----
    N4, C4, H4, W4, R4 = 1, 256, 8, 8, 64
    x4 = jax.random.normal(kx2, (N4, C4, H4, W4), dtype=jnp.float32)
    w1_4 = 0.1 * jax.random.normal(k3, (R4, C4), dtype=jnp.float32)
    w2_4 = 0.1 * jax.random.normal(k4, (C4, R4), dtype=jnp.float32)
    out4 = jax.block_until_ready(
        sem_forward(x4, w1_4, w2_4, mode="fused", excite_on_mxu=True))
    ref4 = sem_reference(x4, w1_4, w2_4)
    assert jnp.allclose(out4, ref4, atol=5e-3, rtol=5e-3), "MXU-excite mismatch"

    print("KERNEL_OK")
</pallas_src>

<mosaic_0001>
module attributes {stable_mosaic.version = 11 : i64} {
  func.func @_sem_fused_kernel(%arg0: i32, %arg1: memref<1x4x256xf32, #tpu.memory_space<vmem>>, %arg2: memref<4x4xf32, #tpu.memory_space<vmem>>, %arg3: memref<4x4xf32, #tpu.memory_space<vmem>>, %arg4: memref<1x4x256xf32, #tpu.memory_space<vmem>>) attributes {dimension_semantics = [#tpu.dimension_semantics<parallel>], iteration_bounds = array<i64: 2>, scalar_prefetch = 0 : i64, scratch_operands = 0 : i64, tpu.core_type = #tpu.core_type<tc>, window_params = [{transform_indices = @transform_0, window_bounds = array<i64: 1, 4, 256>}, {pipeline_mode = #tpu.pipeline_mode<synchronous>, transform_indices = @transform_1, window_bounds = array<i64: 4, 4>}, {pipeline_mode = #tpu.pipeline_mode<synchronous>, transform_indices = @transform_2, window_bounds = array<i64: 4, 4>}, {transform_indices = @transform_3, window_bounds = array<i64: 1, 4, 256>}]} {
    %cst = arith.constant 0.000000e+00 : f32
    %0 = vector.broadcast %cst : f32 to vector<4x128xf32>
    %c0_i32 = arith.constant 0 : i32
    %c128_i32 = arith.constant 128 : i32
    %1 = arith.muli %c0_i32, %c128_i32 : i32
    %2 = tpu.assume_multiple %1, 128 : i32
    %c0 = arith.constant 0 : index
    %c0_0 = arith.constant 0 : index
    %3 = arith.index_cast %2 : i32 to index
    %4 = vector.load %arg1[%c0, %c0_0, %3] : memref<1x4x256xf32, #tpu.memory_space<vmem>>, vector<1x4x128xf32>
    %5 = vector.shape_cast %4 : vector<1x4x128xf32> to vector<4x128xf32>
    %6 = arith.addf %0, %5 : vector<4x128xf32>
    %c1_i32 = arith.constant 1 : i32
    %c128_i32_1 = arith.constant 128 : i32
    %7 = arith.muli %c1_i32, %c128_i32_1 : i32
    %8 = tpu.assume_multiple %7, 128 : i32
    %c0_2 = arith.constant 0 : index
    %c0_3 = arith.constant 0 : index
    %9 = arith.index_cast %8 : i32 to index
    %10 = vector.load %arg1[%c0_2, %c0_3, %9] : memref<1x4x256xf32, #tpu.memory_space<vmem>>, vector<1x4x128xf32>
    %11 = vector.shape_cast %10 : vector<1x4x128xf32> to vector<4x128xf32>
    %12 = arith.addf %6, %11 : vector<4x128xf32>
    %c2_i32 = arith.constant 2 : i32
    %cst_4 = arith.constant dense<0.000000e+00> : vector<4xf32>
    %13 = vector.multi_reduction <add>, %12, %cst_4 [1] : vector<4x128xf32> to vector<4xf32>
    %14 = vector.shape_cast %13 : vector<4xf32> to vector<4x1xf32>
    %cst_5 = arith.constant 3.906250e-03 : f32
    %15 = vector.broadcast %cst_5 : f32 to vector<4x1xf32>
    %16 = arith.mulf %14, %15 : vector<4x1xf32>
    %c0_6 = arith.constant 0 : index
    %c0_7 = arith.constant 0 : index
    %17 = vector.load %arg2[%c0_6, %c0_7] : memref<4x4xf32, #tpu.memory_space<vmem>>, vector<4x4xf32>
    %18 = vector.broadcast %16 : vector<4x1xf32> to vector<4x4xf32>
    %19 = arith.mulf %17, %18 : vector<4x4xf32>
    %cst_8 = arith.constant dense<0.000000e+00> : vector<4xf32>
    %20 = vector.multi_reduction <add>, %19, %cst_8 [0] : vector<4x4xf32> to vector<4xf32>
    %21 = vector.shape_cast %20 : vector<4xf32> to vector<1x4xf32>
    %cst_9 = arith.constant 0.000000e+00 : f32
    %22 = vector.broadcast %cst_9 : f32 to vector<1x4xf32>
    %23 = arith.maximumf %21, %22 : vector<1x4xf32>
    %c0_10 = arith.constant 0 : index
    %c0_11 = arith.constant 0 : index
    %24 = vector.load %arg3[%c0_10, %c0_11] : memref<4x4xf32, #tpu.memory_space<vmem>>, vector<4x4xf32>
    %25 = vector.broadcast %23 : vector<1x4xf32> to vector<4x4xf32>
    %26 = arith.mulf %24, %25 : vector<4x4xf32>
    %cst_12 = arith.constant dense<0.000000e+00> : vector<4xf32>
    %27 = vector.multi_reduction <add>, %26, %cst_12 [1] : vector<4x4xf32> to vector<4xf32>
    %28 = vector.shape_cast %27 : vector<4xf32> to vector<4x1xf32>
    %29 = arith.negf %28 : vector<4x1xf32>
    %30 = math.exp %29 : vector<4x1xf32>
    %cst_13 = arith.constant 1.000000e+00 : f32
    %31 = vector.broadcast %cst_13 : f32 to vector<4x1xf32>
    %32 = arith.addf %31, %30 : vector<4x1xf32>
    %33 = arith.divf %31, %32 : vector<4x1xf32>
    %c0_i32_14 = arith.constant 0 : i32
    %c128_i32_15 = arith.constant 128 : i32
    %34 = arith.muli %c0_i32_14, %c128_i32_15 : i32
    %35 = tpu.assume_multiple %34, 128 : i32
    %c0_16 = arith.constant 0 : index
    %c0_17 = arith.constant 0 : index
    %36 = arith.index_cast %35 : i32 to index
    %37 = vector.load %arg1[%c0_16, %c0_17, %36] : memref<1x4x256xf32, #tpu.memory_space<vmem>>, vector<1x4x128xf32>
    %38 = vector.shape_cast %37 : vector<1x4x128xf32> to vector<4x128xf32>
    %39 = vector.broadcast %33 : vector<4x1xf32> to vector<4x128xf32>
    %40 = arith.mulf %38, %39 : vector<4x128xf32>
    %c0_18 = arith.constant 0 : index
    %c0_19 = arith.constant 0 : index
    %41 = arith.index_cast %35 : i32 to index
    %42 = vector.load %arg4[%c0_18, %c0_19, %41] : memref<1x4x256xf32, #tpu.memory_space<vmem>>, vector<1x4x128xf32>
    %43 = vector.shape_cast %42 : vector<1x4x128xf32> to vector<4x128xf32>
    %44 = vector.shape_cast %40 : vector<4x128xf32> to vector<1x4x128xf32>
    tpu.vector_store %arg4[%c0_18, %c0_19, %41], %44 {strides = array<i32>} : memref<1x4x256xf32, #tpu.memory_space<vmem>>, vector<1x4x128xf32>,
    %c1_i32_20 = arith.constant 1 : i32
    %c128_i32_21 = arith.constant 128 : i32
    %45 = arith.muli %c1_i32_20, %c128_i32_21 : i32
    %46 = tpu.assume_multiple %45, 128 : i32
    %c0_22 = arith.constant 0 : index
    %c0_23 = arith.constant 0 : index
    %47 = arith.index_cast %46 : i32 to index
    %48 = vector.load %arg1[%c0_22, %c0_23, %47] : memref<1x4x256xf32, #tpu.memory_space<vmem>>, vector<1x4x128xf32>
    %49 = vector.shape_cast %48 : vector<1x4x128xf32> to vector<4x128xf32>
    %50 = vector.broadcast %33 : vector<4x1xf32> to vector<4x128xf32>
    %51 = arith.mulf %49, %50 : vector<4x128xf32>
    %c0_24 = arith.constant 0 : index
    %c0_25 = arith.constant 0 : index
    %52 = arith.index_cast %46 : i32 to index
    %53 = vector.load %arg4[%c0_24, %c0_25, %52] : memref<1x4x256xf32, #tpu.memory_space<vmem>>, vector<1x4x128xf32>
    %54 = vector.shape_cast %53 : vector<1x4x128xf32> to vector<4x128xf32>
    %55 = vector.shape_cast %51 : vector<4x128xf32> to vector<1x4x128xf32>
    tpu.vector_store %arg4[%c0_24, %c0_25, %52], %55 {strides = array<i32>} : memref<1x4x256xf32, #tpu.memory_space<vmem>>, vector<1x4x128xf32>,
    %c2_i32_26 = arith.constant 2 : i32
    return
  }
  func.func @transform_0(%arg0: i32) -> (i32, i32, i32) {
    %c0_i32 = arith.constant 0 : i32
    %c0_i32_0 = arith.constant 0 : i32
    %c0_i32_1 = arith.constant 0 : i32
    return %arg0, %c0_i32, %c0_i32_0 : i32, i32, i32
  }
  func.func @transform_1(%arg0: i32) -> (i32, i32) {
    %c0_i32 = arith.constant 0 : i32
    %c0_i32_0 = arith.constant 0 : i32
    %c0_i32_1 = arith.constant 0 : i32
    return %c0_i32, %c0_i32_0 : i32, i32
  }
  func.func @transform_2(%arg0: i32) -> (i32, i32) {
    %c0_i32 = arith.constant 0 : i32
    %c0_i32_0 = arith.constant 0 : i32
    %c0_i32_1 = arith.constant 0 : i32
    return %c0_i32, %c0_i32_0 : i32, i32
  }
  func.func @transform_3(%arg0: i32) -> (i32, i32, i32) {
    %c0_i32 = arith.constant 0 : i32
    %c0_i32_0 = arith.constant 0 : i32
    %c0_i32_1 = arith.constant 0 : i32
    return %arg0, %c0_i32, %c0_i32_0 : i32, i32, i32
  }
}

</mosaic_0001>

<llo_original>
// kernel: tpu_custom_call.1
$region0: #{tpu_custom_call.1}
  #allocation0 [shape = 'u32[]', space=smem, size = 0x4, offset = 0x4, fixed_abs, tag = 'smem constant byte address 0x4 - core index']
  #allocation1 [shape = 'u32[144,128]{1,0:T(1,128)}', space=vmem, size = 0x12000, scoped, tag = 'internal scratch']
  %s0 = inlined_call_operand.hbm [shape: f32[2,4,256], index: 0, kind: input, shape index: {}]
  %s1 = inlined_call_operand.hbm [shape: f32[4,4], index: 1, kind: input, shape index: {}]
  %s2 = inlined_call_operand.hbm [shape: f32[4,4], index: 2, kind: input, shape index: {}]
  %s3 = inlined_call_operand.hbm [shape: f32[2,4,256], index: 3, kind: output, shape index: {}]
  %s4 = sld [smem:[#allocation0]]
  $region57: #{tpu_custom_call.1} parent=0
    _
  %s6 = ssub.s32 1, %s4
  %s7 = scalar_select 0, %s6, %s4
  $region1: #{tpu_custom_call.1} parent=0
    #allocation2 [shape = 'u8[8192]{0}', space=vmem, size = 0x2000, scoped, tag = 'input window, operand 0']
    #allocation3 [shape = 's32[2]{0}', space=sflag, size = 0x8, scoped, tag = 'scoped memory for tpu_custom_call.1']
    #allocation4 [shape = 's32[2]{0}', space=sflag, size = 0x8, scoped, tag = 'scoped memory for tpu_custom_call.1']
    #allocation5 [shape = 'u8[2048]{0}', space=vmem, size = 0x800, scoped, tag = 'input window, operand 1, single buffered']
    #allocation6 [shape = 's32[1]{0}', space=sflag, size = 0x4, scoped, tag = 'scoped memory for tpu_custom_call.1']
    #allocation7 [shape = 'u8[2048]{0}', space=vmem, size = 0x800, scoped, tag = 'input window, operand 2, single buffered']
    #allocation8 [shape = 'u8[8192]{0}', space=vmem, size = 0x2000, scoped, tag = 'output window, operand 0']
    %8 = vsyncpa [#allocation3], 0
    %s9 = scalar_lea.sflag [#allocation3], 1
    %10 = vsyncpa %s9, 0
    %11 = vsyncpa [#allocation6], 0
    %12 = vsyncpa [#allocation4], 0
    %s13 = scalar_lea.sflag [#allocation4], 1
    %14 = vsyncpa %s13, 0
    loop: start=0, step=1, limit=4
    $region2: #{tpu_custom_call.1} parent=1 // loop_pre_header
      _
    $region3: #{tpu_custom_call.1} parent=1 // loop_header
      %s16 = sphi 0, %s20
      %p17 = scmp.ge.s32.totalorder %s16, 4
      %s26 = sphi 0, %s28
      %s29 = sphi 0, %s26
      %s30 = sphi 0, %s29
      %s46 = sphi 0, %s30
      %s50 = sphi 0, %s50
      %s52 = sphi 0, %s50
      %s53 = sphi 0, %s52
      %s67 = sphi 0, %s53
      %s71 = sphi 0, %s71
      %s73 = sphi 0, %s71
      %s74 = sphi 0, %s73
      %s88 = sphi 0, %s74
      %s94 = sphi 0, %s96
      %s97 = sphi 0, %s94
      %s98 = sphi 0, %s97
      %s114 = sphi 0, %s98
    $region4: #{tpu_custom_call.1} parent=1 // loop_header_branch
      %19 = sbr.rel (%p17) target = $region8
    $region5: #{tpu_custom_call.1} parent=1 // loop_body
      %s21 = ssub.s32 %s16, 1
      %s22 = ssub.s32 %s16, 2
      %s23 = sadd.s32 %s16, 1
      %s24 = ssub.s32 %s16, %s23
      %p25 = scmp.eq.s32.totalorder %s24, 0
      %s27 = sadd.s32 %s26, 1
      %s28 = scalar_select %p25, %s26, %s27
      %p31 = pneg %p25
      %p32 = scmp.eq.s32.totalorder %s16, 1
      %p33 = por %p31, %p32
      %p34 = scmp.ne.s32.totalorder %s26, %s29
      %p35 = scmp.eq.s32.totalorder %s16, 0
      %p36 = por %p34, %p35
      %p37 = scmp.ne.s32.totalorder %s26, %s29
      %p38 = scmp.eq.s32.totalorder %s21, 1
      %p39 = por %p37, %p38
      %p40 = scmp.ne.s32.totalorder %s29, %s30
      %p41 = scmp.eq.s32.totalorder %s21, 0
      %p42 = por %p40, %p41
      %p43 = scmp.ne.s32.totalorder %s29, %s30
      %p44 = scmp.eq.s32.totalorder %s22, 1
      %p45 = por %p43, %p44
      %p47 = scmp.ne.s32.totalorder %s30, %s46
      %p48 = scmp.eq.s32.totalorder %s22, 0
      %p49 = por %p47, %p48
      %s51 = sadd.s32 %s50, 1
      %p54 = scmp.eq.s32.totalorder %s16, 1
      %p55 = scmp.ne.s32.totalorder %s50, %s52
      %p56 = scmp.eq.s32.totalorder %s16, 0
      %p57 = por %p55, %p56
      %p58 = scmp.ne.s32.totalorder %s50, %s52
      %p59 = scmp.eq.s32.totalorder %s21, 1
      %p60 = por %p58, %p59
      %p61 = scmp.ne.s32.totalorder %s52, %s53
      %p62 = scmp.eq.s32.totalorder %s21, 0
      %p63 = por %p61, %p62
      %p64 = scmp.ne.s32.totalorder %s52, %s53
      %p65 = scmp.eq.s32.totalorder %s22, 1
      %p66 = por %p64, %p65
      %p68 = scmp.ne.s32.totalorder %s53, %s67
      %p69 = scmp.eq.s32.totalorder %s22, 0
      %p70 = por %p68, %p69
      %s72 = sadd.s32 %s71, 1
      %p75 = scmp.eq.s32.totalorder %s16, 1
      %p76 = scmp.ne.s32.totalorder %s71, %s73
      %p77 = scmp.eq.s32.totalorder %s16, 0
      %p78 = por %p76, %p77
      %p79 = scmp.ne.s32.totalorder %s71, %s73
      %p80 = scmp.eq.s32.totalorder %s21, 1
      %p81 = por %p79, %p80
      %p82 = scmp.ne.s32.totalorder %s73, %s74
      %p83 = scmp.eq.s32.totalorder %s21, 0
      %p84 = por %p82, %p83
      %p85 = scmp.ne.s32.totalorder %s73, %s74
      %p86 = scmp.eq.s32.totalorder %s22, 1
      %p87 = por %p85, %p86
      %p89 = scmp.ne.s32.totalorder %s74, %s88
      %p90 = scmp.eq.s32.totalorder %s22, 0
      %p91 = por %p89, %p90
      %s92 = ssub.s32 %s16, %s23
      %p93 = scmp.eq.s32.totalorder %s92, 0
      %s95 = sadd.s32 %s94, 1
      %s96 = scalar_select %p93, %s94, %s95
      %p99 = pneg %p93
      %p100 = scmp.eq.s32.totalorder %s16, 1
      %p101 = por %p99, %p100
      %p102 = scmp.ne.s32.totalorder %s94, %s97
      %p103 = scmp.eq.s32.totalorder %s16, 0
      %p104 = por %p102, %p103
      %p105 = scmp.ne.s32.totalorder %s94, %s97
      %p106 = scmp.eq.s32.totalorder %s21, 1
      %p107 = por %p105, %p106
      %p108 = scmp.ne.s32.totalorder %s97, %s98
      %p109 = scmp.eq.s32.totalorder %s21, 0
      %p110 = por %p108, %p109
      %p111 = scmp.ne.s32.totalorder %s97, %s98
      %p112 = scmp.eq.s32.totalorder %s22, 1
      %p113 = por %p111, %p112
      %p115 = scmp.ne.s32.totalorder %s98, %s114
      %p116 = scmp.eq.s32.totalorder %s22, 0
      %p117 = por %p115, %p116
      %p118 = scmp.le.s32.totalorder 1, %s16
      %p119 = scmp.lt.s32.totalorder %s16, 3
      %p120 = pnand %p118, %p119
      %p121 = pneg %p120
      // Predicated region
      $region9: #{tpu_custom_call.1} parent=5 // pred_check
        _
      $region10: #{tpu_custom_call.1} parent=5 // pred_check_branch
        %123 = sbr.rel (%p120) target = $region12
      $region11: #{tpu_custom_call.1} parent=5 // pred_region
        %s124 = ssub.s32 %s16, 1
        // Predicated region
        $region13: #{tpu_custom_call.1} parent=11 // pred_check
          %p125 = pneg %p63
        $region14: #{tpu_custom_call.1} parent=11 // pred_check_branch
          %127 = sbr.rel (%p125) target = $region16
        $region15: #{tpu_custom_call.1} parent=11 // pred_region
          %s129 = ssub.s32 64, 64
          %130 = vsyncadd [#allocation6], %s129
          %s132 = sshll.u32 [#allocation5], 4
          %s133 = int_to_ptr.vmem [resolvable:$true] %s132
          %135 = dma.hbm_to_vmem [thread:$0]  %s1, 64, %s133, [#allocation6]
        $region16: #{tpu_custom_call.1} parent=11 // pred_fallthru
          _
        // Predicated region
        $region17: #{tpu_custom_call.1} parent=11 // pred_check
          %p136 = pneg %p84
        $region18: #{tpu_custom_call.1} parent=11 // pred_check_branch
          %138 = sbr.rel (%p136) target = $region20
        $region19: #{tpu_custom_call.1} parent=11 // pred_region
          %s140 = ssub.s32 64, 64
          %141 = vsyncadd [#allocation6], %s140
          %s143 = sshll.u32 [#allocation7], 4
          %s144 = int_to_ptr.vmem [resolvable:$true] %s143
          %146 = dma.hbm_to_vmem [thread:$0]  %s2, 64, %s144, [#allocation6]
        $region20: #{tpu_custom_call.1} parent=11 // pred_fallthru
          _
      $region12: #{tpu_custom_call.1} parent=5 // pred_fallthru
        _
      %p147 = scmp.lt.s32.totalorder %s16, 2
      // Predicated region
      $region21: #{tpu_custom_call.1} parent=5 // pred_check
        %p148 = pneg %p147
      $region22: #{tpu_custom_call.1} parent=5 // pred_check_branch
        %150 = sbr.rel (%p148) target = $region24
      $region23: #{tpu_custom_call.1} parent=5 // pred_region
        // Predicated region
        $region25: #{tpu_custom_call.1} parent=23 // pred_check
          %p151 = pneg %p36
        $region26: #{tpu_custom_call.1} parent=23 // pred_check_branch
          %153 = sbr.rel (%p151) target = $region28
        $region27: #{tpu_custom_call.1} parent=23 // pred_region
          %s154 = sand.u32 %s26, 1
          %s155 = scalar_lea.sflag [#allocation3], %s154
          %s156 = sand.u32 %s26, 1
          %s157 = smul.addr %s156, 8
          %s158 = scalar_lea.vmem [#allocation2], %s157
          %s160 = ssub.s32 128, 128
          %161 = vsyncadd %s155, %s160
          %s162 = smul.addr %s16, 2
          %s163 = smul.addr %s162, 64
          %s164 = scalar_lea.hbm %s0, %s163
          %s166 = sshll.u32 %s158, 4
          %s167 = int_to_ptr.vmem [resolvable:$true] %s166
          %169 = dma.hbm_to_vmem [thread:$0]  %s164, 128, %s167, %s155
        $region28: #{tpu_custom_call.1} parent=23 // pred_fallthru
          _
      $region24: #{tpu_custom_call.1} parent=5 // pred_fallthru
        _
      %p170 = scmp.le.s32.totalorder 1, %s16
      %p171 = scmp.lt.s32.totalorder %s16, 3
      %p172 = pnand %p170, %p171
      %p173 = pneg %p172
      // Predicated region
      $region29: #{tpu_custom_call.1} parent=5 // pred_check
        _
      $region30: #{tpu_custom_call.1} parent=5 // pred_check_branch
        %175 = sbr.rel (%p172) target = $region32
      $region31: #{tpu_custom_call.1} parent=5 // pred_region
        %s176 = ssub.s32 %s16, 1
        %s177 = sand.u32 %s29, 1
        %s178 = scalar_lea.sflag [#allocation3], %s177
        %s179 = sand.u32 %s29, 1
        %s180 = smul.addr %s179, 8
        %s181 = scalar_lea.vmem [#allocation2], %s180
        // Predicated region
        $region33: #{tpu_custom_call.1} parent=31 // pred_check
          %p182 = pneg %p42
        $region34: #{tpu_custom_call.1} parent=31 // pred_check_branch
          %184 = sbr.rel (%p182) target = $region36
        $region35: #{tpu_custom_call.1} parent=31 // pred_region
          %185 = dma.done %s178, 128
        $region36: #{tpu_custom_call.1} parent=31 // pred_fallthru
          _
        // Predicated region
        $region37: #{tpu_custom_call.1} parent=31 // pred_check
          %p186 = pneg %p63
        $region38: #{tpu_custom_call.1} parent=31 // pred_check_branch
          %188 = sbr.rel (%p186) target = $region40
        $region39: #{tpu_custom_call.1} parent=31 // pred_region
          %189 = dma.done [#allocation6], 64
        $region40: #{tpu_custom_call.1} parent=31 // pred_fallthru
          _
        // Predicated region
        $region41: #{tpu_custom_call.1} parent=31 // pred_check
          %p190 = pneg %p84
        $region42: #{tpu_custom_call.1} parent=31 // pred_check_branch
          %192 = sbr.rel (%p190) target = $region44
        $region43: #{tpu_custom_call.1} parent=31 // pred_region
          %193 = dma.done [#allocation6], 64
        $region44: #{tpu_custom_call.1} parent=31 // pred_fallthru
          _
        %s194 = sand.u32 %s29, 1
        %s195 = scalar_lea.sflag [#allocation3], %s194
        %s196 = sand.u32 %s29, 1
        %s197 = smul.addr %s196, 8
        %s198 = scalar_lea.vmem [#allocation2], %s197
        %p199 = pneg %p42
        %p200 = pneg %p39
        %p201 = pneg %p63
        %p202 = pneg %p60
        %p203 = pneg %p84
        %p204 = pneg %p81
        %p205 = pneg %p110
        %p206 = pneg %p107
        %s207 = sand.u32 %s97, 1
        %s208 = scalar_lea.sflag [#allocation4], %s207
        %s209 = sand.u32 %s97, 1
        %s210 = smul.addr %s209, 8
        %s211 = scalar_lea.vmem [#allocation8], %s210
        %v212 = vld [vmem:[%s181] sm:$0xf]
        %v213 = vadd.f32 %v212, 0.0
        %s214 = scalar_lea.vmem %s181, 4 [#allocation2]
        %v215 = vld [vmem:[%s214] sm:$0xf]
        %v216 = vadd.f32 %v213, %v215
        %vm217 = vcmask 1043456
        %v218 = vsel %vm217, %v216, 0.0
        %219 = vadd.xlane.f32.xlu0 %v218
        %v220 = vpop.xlane.xlu0 %219
        %v221 = vmul.f32 %v220, 0.00390625
        %v222 = vld [vmem:[#allocation5] sm:$0xf]
        %v223 = vmul.f32 %v222, %v221
        %vm224 = vcmask 27648
        %v225 = vsel %vm224, %v223, 0.0
        %v226 = vrot.slane %v225, 4
        %v227 = vadd.f32 %v225, %v226
        %v228 = vrot.slane %v227, 2
        %v229 = vadd.f32 %v227, %v228
        %v230 = vrot.slane %v229, 1
        %v231 = vadd.f32 %v229, %v230
        %v232 = vmax.f32 %v231, 0.0
        %v233 = vld [vmem:[#allocation7] sm:$0xf]
        %v234 = vmul.f32 %v233, %v232
        %v235 = vsel %vm224, %v234, 0.0
        %236 = vadd.xlane.f32.xlu0 %v235
        %v237 = vpop.xlane.xlu0 %236
        %v238 = vxor.u32 %v237, 2147483648
        %v239 = vmul.f32 %v238, 1.442695
        %v240 = vpow.pop %v239
        %v241 = vadd.f32 %v240, 1.0
        %v242 = vrcp.pop %v241
        %v243 = vmul.f32 1.0, %v242
        %v244 = vmul.f32 %v212, %v243
        %245 = vst [vmem:[%s211] sm:$0xf] %v244
        %v246 = vld [vmem:[%s214] sm:$0xf]
        %v247 = vmul.f32 %v246, %v243
        %s248 = scalar_lea.vmem %s211, 4 [#allocation8]
        %249 = vst [vmem:[%s248] sm:$0xf] %v247
        %s250 = sand.u32 %s97, 1
        %s251 = scalar_lea.sflag [#allocation4], %s250
        %s252 = sand.u32 %s97, 1
        %s253 = smul.addr %s252, 8
        %s254 = scalar_lea.vmem [#allocation8], %s253
        // Predicated region
        $region45: #{tpu_custom_call.1} parent=31 // pred_check
          %p255 = pneg %p107
        $region46: #{tpu_custom_call.1} parent=31 // pred_check_branch
          %257 = sbr.rel (%p255) target = $region48
        $region47: #{tpu_custom_call.1} parent=31 // pred_region
          %s259 = ssub.s32 128, 128
          %260 = vsyncadd %s251, %s259
          %s261 = smul.addr %s21, 2
          %s262 = smul.addr %s261, 64
          %s263 = scalar_lea.hbm %s3, %s262
          %s265 = sshll.u32 %s254, 4
          %s266 = int_to_ptr.vmem [resolvable:$true] %s265
          %268 = dma.vmem_to_hbm [thread:$0]  %s266, 128, %s263, %s251
        $region48: #{tpu_custom_call.1} parent=31 // pred_fallthru
          _
      $region32: #{tpu_custom_call.1} parent=5 // pred_fallthru
        _
      %p269 = scmp.le.s32.totalorder 2, %s16
      // Predicated region
      $region49: #{tpu_custom_call.1} parent=5 // pred_check
        %p270 = pneg %p269
      $region50: #{tpu_custom_call.1} parent=5 // pred_check_branch
        %272 = sbr.rel (%p270) target = $region52
      $region51: #{tpu_custom_call.1} parent=5 // pred_region
        %s273 = ssub.s32 %s16, 2
        // Predicated region
        $region53: #{tpu_custom_call.1} parent=51 // pred_check
          %p274 = pneg %p113
        $region54: #{tpu_custom_call.1} parent=51 // pred_check_branch
          %276 = sbr.rel (%p274) target = $region56
        $region55: #{tpu_custom_call.1} parent=51 // pred_region
          %s277 = sand.u32 %s98, 1
          %s278 = scalar_lea.sflag [#allocation4], %s277
          %s279 = sand.u32 %s98, 1
          %s280 = smul.addr %s279, 8
          %s281 = scalar_lea.vmem [#allocation8], %s280
          %282 = dma.done %s278, 128
        $region56: #{tpu_custom_call.1} parent=51 // pred_fallthru
          _
      $region52: #{tpu_custom_call.1} parent=5 // pred_fallthru
        _
    $region6: #{tpu_custom_call.1} parent=1 // loop_footer
      %s20 = sadd.s32 1, %s16
    $region7: #{tpu_custom_call.1} parent=1 // loop_footer_branch
      %15 = sbr.rel target = $region3
    $region8: #{tpu_custom_call.1} parent=1 // loop_exit
      _
    %283 = vsyncpa [#allocation3], 1
    %s284 = scalar_lea.sflag [#allocation3], 1
    %285 = vsyncpa %s284, 1
    %286 = vsyncpa [#allocation6], 1
    %287 = vsyncpa [#allocation4], 1
    %s288 = scalar_lea.sflag [#allocation4], 1
    %289 = vsyncpa %s288, 1

</llo_original>
